<compile_context>
chip_gen: v7x
topology: tpu7x:2x2x1
jax: 0.10.0
libtpu: 0.0.40
codegen_flags: <defaults>
</compile_context>

<pallas_src>
import functools
import math

import jax
import jax.numpy as jnp
from jax.experimental import pallas as pl
from jax.experimental.pallas import tpu as pltpu


# ---------------------------------------------------------------------------
# Kernel: per-row-block partial sum of squared differences
# ---------------------------------------------------------------------------
def _content_loss_kernel(x_ref, t_ref, psum_ref, acc_ref, *, lane_chunks):
    k = pl.program_id(1)  # lane / reduction axis

    @pl.when(k == 0)
    def _init():
        acc_ref[...] = jnp.zeros_like(acc_ref)

    # 128-lane, tile-aligned slices: pure VPU work, no cross-lane movement,
    # accumulator stays one 128-lane column wide.
    for c in range(lane_chunks):
        xs = x_ref[:, pl.ds(c * 128, 128)].astype(jnp.float32)
        ts = t_ref[:, pl.ds(c * 128, 128)].astype(jnp.float32)
        d = xs - ts
        acc_ref[...] += d * d

    @pl.when(k == pl.num_programs(1) - 1)
    def _finalize():
        # One small cross-sublane reduce per row block; lane-dense (1, 128)
        # partial written to this row block's own output slot (no races when
        # the parallel axis is split across TensorCores).
        psum_ref[...] = jnp.sum(acc_ref[...], axis=0, keepdims=True)


# ---------------------------------------------------------------------------
# Layout / tiling helpers
# ---------------------------------------------------------------------------
def _cdiv(a, b):
    return -(-a // b)


def _divisors(m):
    out = set()
    i = 1
    while i * i <= m:
        if m % i == 0:
            out.add(i)
            out.add(m // i)
        i += 1
    return sorted(out)


def _choose_layout(shape):
    """Sublane/lane-dense 2-D view (rows, lanes): rows % 8 == 0, lanes % 128 == 0."""
    n = math.prod(shape)
    if len(shape) == 4:
        r = shape[0] * shape[1]
        c = shape[2] * shape[3]
        if r % 8 == 0 and c % 128 == 0:
            return r, c  # natural NCHW view, no copy / no pad
    # Generic: factor the (padded-to-1024) element count into (8r) x (128l),
    # aiming roughly square.  Pad is zero whenever n % 1024 == 0.
    m = _cdiv(n, 1024)
    l0 = max(1, math.isqrt(max(1, m // 16)))  # rows == lanes when l = sqrt(m/16)
    l = min(_divisors(m), key=lambda d: (abs(d - l0), d))
    lanes = 128 * l
    rows = (1024 * m) // lanes  # == 8 * (m // l), multiple of 8
    return rows, lanes


def _as_layout(a, rows, lanes):
    flat = a.reshape(-1)
    pad = rows * lanes - flat.size
    if pad:
        flat = jnp.pad(flat, (0, pad))  # zero pad contributes 0 to the SSE
    return flat.reshape(rows, lanes)


def _vmem_budget():
    """(tile budget bytes, vmem_limit_bytes) with headroom for v5e/v6e/v7x."""
    try:
        cap = int(pltpu.get_tpu_info().vmem_capacity_bytes)
    except Exception:
        cap = 64 * 1024 * 1024  # conservative: v7x per-TC physical VMEM
    budget = min(24 * 1024 * 1024, cap // 4)  # 24 MiB on 128 MiB chips, 16 MiB on v7x
    limit = min(cap // 2, budget + 8 * 1024 * 1024)
    return budget, limit


def _pick_tiles(rows, lanes, itemsize, vmem_budget):
    """Pick (block_rows, block_lanes) targeting ~1 MiB input blocks."""
    target_blk = 1 << 20
    max_blk = 2 << 20  # mem-bound roofline plateaus around 1-2 MiB blocks
    row_divs = [d for d in range(8, min(rows, 1024) + 1, 8) if rows % d == 0]
    lane_divs = [d for d in range(128, min(lanes, 4096) + 1, 128) if lanes % d == 0]
    best, best_key = (row_divs[0], lane_divs[0]), None
    for br in row_divs:
        acc_bytes = br * 128 * 4
        for tk in lane_divs:
            blk = br * tk * itemsize
            # 2 inputs x 2 pipeline buffers + small acc + small out block
            vmem = 4 * blk + acc_bytes + 2 * 8 * 128 * 4
            if blk > max_blk or vmem > vmem_budget:
                break
            key = (rows // br >= 2,          # >= 2 row blocks: v7x 2-TC split
                   -abs(blk - target_blk))   # blocks near ~1 MiB
            if best_key is None or key > best_key:
                best_key, best = key, (br, tk)
    return best


# ---------------------------------------------------------------------------
# Wrappers
# ---------------------------------------------------------------------------
def content_loss_pallas(x, target, *, block_rows=None, block_lanes=None):
    """mean((x - target)^2) over all elements via a Pallas TPU kernel."""
    assert x.shape == target.shape, (x.shape, target.shape)
    n = math.prod(x.shape)
    rows, lanes = _choose_layout(x.shape)
    x2 = _as_layout(x, rows, lanes)
    t2 = _as_layout(target, rows, lanes)
    itemsize = max(jnp.dtype(x2.dtype).itemsize, jnp.dtype(t2.dtype).itemsize)

    budget, vmem_limit = _vmem_budget()
    br, tk = _pick_tiles(rows, lanes, itemsize, budget)
    if block_rows is not None:
        assert block_rows % 8 == 0 and rows % block_rows == 0, (block_rows, rows)
        br = block_rows
    if block_lanes is not None:
        assert block_lanes % 128 == 0 and lanes % block_lanes == 0, (block_lanes, lanes)
        tk = block_lanes
    n_row_blocks = rows // br

    kernel = functools.partial(_content_loss_kernel, lane_chunks=tk // 128)

    psums = pl.pallas_call(
        kernel,
        out_shape=jax.ShapeDtypeStruct((n_row_blocks, 128), jnp.float32),
        grid_spec=pltpu.PrefetchScalarGridSpec(
            num_scalar_prefetch=0,
            grid=(n_row_blocks, lanes // tk),
            in_specs=[
                # TODO(synk): sweep pipeline_mode=pl.Buffered(3) on real workloads.
                pl.BlockSpec((br, tk), lambda i, k: (i, k)),
                pl.BlockSpec((br, tk), lambda i, k: (i, k)),
            ],
            out_specs=pl.BlockSpec((1, 128), lambda i, k: (i, 0)),
            scratch_shapes=[pltpu.VMEM((br, 128), jnp.float32)],
        ),
        compiler_params=pltpu.CompilerParams(
            dimension_semantics=("parallel", "arbitrary"),
            vmem_limit_bytes=vmem_limit,
        ),
        cost_estimate=pl.CostEstimate(
            flops=3 * rows * lanes,
            bytes_accessed=2 * rows * lanes * itemsize + n_row_blocks * 128 * 4,
            transcendentals=0,
        ),
    )(x2, t2)

    return jnp.sum(psums) * (1.0 / n)


def content_loss(x, target, *, min_pallas_elems=1 << 18):
    """Size-gated entry: tiny feature maps stay in plain XLA (fusion beats
    custom-call + grid-step overhead there); large maps use the kernel."""
    if math.prod(x.shape) < min_pallas_elems:
        xf = jnp.asarray(x, jnp.float32)
        tf = jnp.asarray(target, jnp.float32)
        return jnp.mean((xf - tf) ** 2)
    return content_loss_pallas(x, target)


# ---------------------------------------------------------------------------
# Module port
# ---------------------------------------------------------------------------
class ContentLoss:
    """JAX/Pallas port of the PyTorch ContentLoss module (forward only)."""

    def __init__(self, target):
        # .detach() -> stop_gradient; target is a fixed feature map
        self.target = jax.lax.stop_gradient(jnp.asarray(target))
        self.loss = None

    def __call__(self, x):
        self.loss = content_loss(x, self.target)
        return x  # forward returns its input unchanged

    # TODO(synk): backward/autograd (custom_vjp) for the stored loss is not implemented.


if __name__ == "__main__":
    key = jax.random.PRNGKey(0)
    k_tgt, k_in, k_t2, k_i2, k_t3, k_i3 = jax.random.split(key, 6)

    # NCHW: batch=2, channels=4, spatial=16x16
    target = jax.random.normal(k_tgt, (2, 4, 16, 16), dtype=jnp.float32)
    x = jax.random.normal(k_in, (2, 4, 16, 16), dtype=jnp.float32)
    ref = jnp.mean((x - target) ** 2)

    # Module path (size-gated).
    module = ContentLoss(target)
    out = jax.block_until_ready(module(x))
    loss = jax.block_until_ready(module.loss)
    assert jnp.allclose(out, x), "forward must return its input unchanged"
    assert jnp.allclose(loss, ref, rtol=1e-5, atol=1e-6), (loss, ref)

    # Kernel path on the same small input (natural (8, 256) layout, grid (1, 1)).
    k_loss = jax.block_until_ready(content_loss_pallas(x, target))
    assert jnp.allclose(k_loss, ref, rtol=1e-5, atol=1e-6), (k_loss, ref)

    # Multi-step reduction axis (grid (1, 2)).
    k_loss2 = jax.block_until_ready(content_loss_pallas(x, target, block_lanes=128))
    assert jnp.allclose(k_loss2, ref, rtol=1e-5, atol=1e-6), (k_loss2, ref)

    # Multiple row blocks on the "parallel" axis + reduction axis (grid (4, 2)).
    tgt_b = jax.random.normal(k_t2, (4, 8, 16, 16), dtype=jnp.float32)
    x_b = jax.random.normal(k_i2, (4, 8, 16, 16), dtype=jnp.float32)
    ref_b = jnp.mean((x_b - tgt_b) ** 2)
    k_loss_b = jax.block_until_ready(
        content_loss_pallas(x_b, tgt_b, block_rows=8, block_lanes=128))
    assert jnp.allclose(k_loss_b, ref_b, rtol=1e-5, atol=1e-6), (k_loss_b, ref_b)

    # Non-aligned shape -> generic (zero-padded) layout path.
    tgt_o = jax.random.normal(k_t3, (2, 3, 15, 17), dtype=jnp.float32)
    x_o = jax.random.normal(k_i3, (2, 3, 15, 17), dtype=jnp.float32)
    ref_o = jnp.mean((x_o - tgt_o) ** 2)
    k_loss_o = jax.block_until_ready(content_loss_pallas(x_o, tgt_o))
    assert jnp.allclose(k_loss_o, ref_o, rtol=1e-5, atol=1e-6), (k_loss_o, ref_o)

    # bf16 inputs (f32 accumulation in-kernel).
    x16, t16 = x.astype(jnp.bfloat16), target.astype(jnp.bfloat16)
    ref16 = jnp.mean((x16.astype(jnp.float32) - t16.astype(jnp.float32)) ** 2)
    k_loss16 = jax.block_until_ready(content_loss_pallas(x16, t16))
    assert jnp.allclose(k_loss16, ref16, rtol=1e-5, atol=1e-6), (k_loss16, ref16)

    print("KERNEL_OK")
</pallas_src>

<mosaic_0001>
module attributes {stable_mosaic.version = 11 : i64} {
  func.func @_content_loss_kernel(%arg0: i32, %arg1: i32, %arg2: memref<8x256xf32, #tpu.memory_space<vmem>>, %arg3: memref<8x256xf32, #tpu.memory_space<vmem>>, %arg4: memref<1x128xf32, #tpu.memory_space<vmem>>, %arg5: memref<8x128xf32, #tpu.memory_space<vmem>>) attributes {dimension_semantics = [#tpu.dimension_semantics<parallel>, #tpu.dimension_semantics<arbitrary>], iteration_bounds = array<i64: 1, 1>, scalar_prefetch = 0 : i64, scratch_operands = 1 : i64, tpu.core_type = #tpu.core_type<tc>, window_params = [{transform_indices = @transform_0, window_bounds = array<i64: 8, 256>}, {transform_indices = @transform_1, window_bounds = array<i64: 8, 256>}, {transform_indices = @transform_2, window_bounds = array<i64: 1, 128>}]} {
    %c0_i32 = arith.constant 0 : i32
    %0 = arith.cmpi eq, %arg1, %c0_i32 : i32
    %1 = arith.extui %0 : i1 to i32
    %c0_i32_0 = arith.constant 0 : i32
    %2 = arith.cmpi ne, %1, %c0_i32_0 : i32
    scf.if %2 {
      %cst = arith.constant 0.000000e+00 : f32
      %20 = vector.broadcast %cst : f32 to vector<8x128xf32>
      %c0_17 = arith.constant 0 : index
      %c0_18 = arith.constant 0 : index
      %21 = vector.load %arg5[%c0_17, %c0_18] : memref<8x128xf32, #tpu.memory_space<vmem>>, vector<8x128xf32>
      tpu.vector_store %arg5[%c0_17, %c0_18], %20 {strides = array<i32>} : memref<8x128xf32, #tpu.memory_space<vmem>>, vector<8x128xf32>,
    } else {
    }
    %c0 = arith.constant 0 : index
    %c0_1 = arith.constant 0 : index
    %3 = vector.load %arg2[%c0, %c0_1] : memref<8x256xf32, #tpu.memory_space<vmem>>, vector<8x128xf32>
    %c0_2 = arith.constant 0 : index
    %c0_3 = arith.constant 0 : index
    %4 = vector.load %arg3[%c0_2, %c0_3] : memref<8x256xf32, #tpu.memory_space<vmem>>, vector<8x128xf32>
    %5 = arith.subf %3, %4 : vector<8x128xf32>
    %c0_4 = arith.constant 0 : index
    %c0_5 = arith.constant 0 : index
    %6 = vector.load %arg5[%c0_4, %c0_5] : memref<8x128xf32, #tpu.memory_space<vmem>>, vector<8x128xf32>
    %7 = arith.mulf %5, %5 : vector<8x128xf32>
    %8 = arith.addf %6, %7 : vector<8x128xf32>
    %c0_6 = arith.constant 0 : index
    %c0_7 = arith.constant 0 : index
    %9 = vector.load %arg5[%c0_6, %c0_7] : memref<8x128xf32, #tpu.memory_space<vmem>>, vector<8x128xf32>
    tpu.vector_store %arg5[%c0_6, %c0_7], %8 {strides = array<i32>} : memref<8x128xf32, #tpu.memory_space<vmem>>, vector<8x128xf32>,
    %c0_8 = arith.constant 0 : index
    %c128 = arith.constant 128 : index
    %10 = vector.load %arg2[%c0_8, %c128] : memref<8x256xf32, #tpu.memory_space<vmem>>, vector<8x128xf32>
    %c0_9 = arith.constant 0 : index
    %c128_10 = arith.constant 128 : index
    %11 = vector.load %arg3[%c0_9, %c128_10] : memref<8x256xf32, #tpu.memory_space<vmem>>, vector<8x128xf32>
    %12 = arith.subf %10, %11 : vector<8x128xf32>
    %c0_11 = arith.constant 0 : index
    %c0_12 = arith.constant 0 : index
    %13 = vector.load %arg5[%c0_11, %c0_12] : memref<8x128xf32, #tpu.memory_space<vmem>>, vector<8x128xf32>
    %14 = arith.mulf %12, %12 : vector<8x128xf32>
    %15 = arith.addf %13, %14 : vector<8x128xf32>
    %c0_13 = arith.constant 0 : index
    %c0_14 = arith.constant 0 : index
    %16 = vector.load %arg5[%c0_13, %c0_14] : memref<8x128xf32, #tpu.memory_space<vmem>>, vector<8x128xf32>
    tpu.vector_store %arg5[%c0_13, %c0_14], %15 {strides = array<i32>} : memref<8x128xf32, #tpu.memory_space<vmem>>, vector<8x128xf32>,
    %c0_i32_15 = arith.constant 0 : i32
    %17 = arith.cmpi eq, %arg1, %c0_i32_15 : i32
    %18 = arith.extui %17 : i1 to i32
    %c0_i32_16 = arith.constant 0 : i32
    %19 = arith.cmpi ne, %18, %c0_i32_16 : i32
    scf.if %19 {
      %c0_17 = arith.constant 0 : index
      %c0_18 = arith.constant 0 : index
      %20 = vector.load %arg5[%c0_17, %c0_18] : memref<8x128xf32, #tpu.memory_space<vmem>>, vector<8x128xf32>
      %cst = arith.constant dense<0.000000e+00> : vector<128xf32>
      %21 = vector.multi_reduction <add>, %20, %cst [0] : vector<8x128xf32> to vector<128xf32>
      %22 = vector.shape_cast %21 : vector<128xf32> to vector<1x128xf32>
      %c0_19 = arith.constant 0 : index
      %c0_20 = arith.constant 0 : index
      %23 = vector.load %arg4[%c0_19, %c0_20] : memref<1x128xf32, #tpu.memory_space<vmem>>, vector<1x128xf32>
      tpu.vector_store %arg4[%c0_19, %c0_20], %22 {strides = array<i32>} : memref<1x128xf32, #tpu.memory_space<vmem>>, vector<1x128xf32>,
    } else {
    }
    return
  }
  func.func @transform_0(%arg0: i32, %arg1: i32) -> (i32, i32) {
    %c0_i32 = arith.constant 0 : i32
    return %arg0, %arg1 : i32, i32
  }
  func.func @transform_1(%arg0: i32, %arg1: i32) -> (i32, i32) {
    %c0_i32 = arith.constant 0 : i32
    return %arg0, %arg1 : i32, i32
  }
  func.func @transform_2(%arg0: i32, %arg1: i32) -> (i32, i32) {
    %c0_i32 = arith.constant 0 : i32
    %c0_i32_0 = arith.constant 0 : i32
    return %arg0, %c0_i32 : i32, i32
  }
}

</mosaic_0001>

<llo_original>
// kernel: tpu_custom_call.1
$region0: #{tpu_custom_call.1}
  #allocation0 [shape = 'u32[]', space=smem, size = 0x4, offset = 0x4, fixed_abs, tag = 'smem constant byte address 0x4 - core index']
  #allocation1 [shape = 'u32[144,128]{1,0:T(1,128)}', space=vmem, size = 0x12000, scoped, tag = 'internal scratch']
  #allocation2 [shape = 'f32[8,128]{1,0:T(8,128)}', space=vmem, size = 0x1000, scoped, tag = 'scratch operand']
  %s0 = inlined_call_operand.hbm [shape: f32[8,256], index: 0, kind: input, shape index: {}]
  %s1 = inlined_call_operand.hbm [shape: f32[8,256], index: 1, kind: input, shape index: {}]
  %s2 = inlined_call_operand.hbm [shape: f32[1,128], index: 2, kind: output, shape index: {}]
  %s3 = sld [smem:[#allocation0]]
  $region34: #{tpu_custom_call.1} parent=0
    _
  %s5 = ssub.s32 1, %s3
  %s6 = scalar_select 0, %s5, %s3
  $region1: #{tpu_custom_call.1} parent=0
    #allocation3 [shape = 'u8[8192]{0}', space=vmem, size = 0x2000, scoped, tag = 'input window, operand 0, single buffered']
    #allocation4 [shape = 's32[1]{0}', space=sflag, size = 0x4, scoped, tag = 'scoped memory for tpu_custom_call.1']
    #allocation5 [shape = 's32[1]{0}', space=sflag, size = 0x4, scoped, tag = 'scoped memory for tpu_custom_call.1']
    #allocation6 [shape = 'u8[8192]{0}', space=vmem, size = 0x2000, scoped, tag = 'input window, operand 1, single buffered']
    #allocation7 [shape = 's32[1]{0}', space=sflag, size = 0x4, scoped, tag = 'scoped memory for tpu_custom_call.1']
    #allocation8 [shape = 'u8[512]{0}', space=vmem, size = 0x400, scoped, tag = 'output window, operand 0, single buffered']
    %7 = vsyncpa [#allocation4], 0
    %8 = vsyncpa [#allocation7], 0
    %9 = vsyncpa [#allocation5], 0
    // Predicated region
    $region2: #{tpu_custom_call.1} parent=1 // pred_check
      _
    $region3: #{tpu_custom_call.1} parent=1 // pred_check_branch
      %11 = sbr.rel (0) target = $region5
    $region4: #{tpu_custom_call.1} parent=1 // pred_region
      %s13 = ssub.s32 256, 256
      %14 = vsyncadd [#allocation4], %s13
      %s16 = sshll.u32 [#allocation3], 4
      %s17 = int_to_ptr.vmem [resolvable:$true] %s16
      %19 = dma.hbm_to_vmem [thread:$0]  %s0, 256, %s17, [#allocation4]
    $region5: #{tpu_custom_call.1} parent=1 // pred_fallthru
      _
    // Predicated region
    $region6: #{tpu_custom_call.1} parent=1 // pred_check
      _
    $region7: #{tpu_custom_call.1} parent=1 // pred_check_branch
      %21 = sbr.rel (0) target = $region9
    $region8: #{tpu_custom_call.1} parent=1 // pred_region
      %s23 = ssub.s32 256, 256
      %24 = vsyncadd [#allocation7], %s23
      %s26 = sshll.u32 [#allocation6], 4
      %s27 = int_to_ptr.vmem [resolvable:$true] %s26
      %29 = dma.hbm_to_vmem [thread:$0]  %s1, 256, %s27, [#allocation7]
    $region9: #{tpu_custom_call.1} parent=1 // pred_fallthru
      _
    // Predicated region
    $region10: #{tpu_custom_call.1} parent=1 // pred_check
      _
    $region11: #{tpu_custom_call.1} parent=1 // pred_check_branch
      %31 = sbr.rel (0) target = $region13
    $region12: #{tpu_custom_call.1} parent=1 // pred_region
      %32 = dma.done [#allocation4], 256
    $region13: #{tpu_custom_call.1} parent=1 // pred_fallthru
      _
    // Predicated region
    $region14: #{tpu_custom_call.1} parent=1 // pred_check
      _
    $region15: #{tpu_custom_call.1} parent=1 // pred_check_branch
      %34 = sbr.rel (0) target = $region17
    $region16: #{tpu_custom_call.1} parent=1 // pred_region
      %35 = dma.done [#allocation7], 256
    $region17: #{tpu_custom_call.1} parent=1 // pred_fallthru
      _
    %p36 = scmp.eq.s32.totalorder 0, 0
    // Predicated region
    $region18: #{tpu_custom_call.1} parent=1 // pred_check
      %p37 = pneg %p36
    $region19: #{tpu_custom_call.1} parent=1 // pred_check_branch
      %39 = sbr.rel (%p37) target = $region21
    $region20: #{tpu_custom_call.1} parent=1 // pred_region
      %40 = vst [vmem:[#allocation2] sm:$0xff] 0.0
    $region21: #{tpu_custom_call.1} parent=1 // pred_fallthru
      _
    %v41 = vld [vmem:[#allocation3] sm:$0xff]
    %v42 = vld [vmem:[#allocation6] sm:$0xff]
    %v43 = vsub.f32 %v41, %v42
    %v44 = vld [vmem:[#allocation2] sm:$0xff]
    %v45 = vmul.f32 %v43, %v43
    %v46 = vadd.f32 %v44, %v45
    %47 = vst [vmem:[#allocation2] sm:$0xff] %v46
    %v48 = vld [vmem:[#allocation3 + $0x8] sm:$0xff]
    %v49 = vld [vmem:[#allocation6 + $0x8] sm:$0xff]
    %v50 = vsub.f32 %v48, %v49
    %v51 = vld [vmem:[#allocation2] sm:$0xff]
    %v52 = vmul.f32 %v50, %v50
    %v53 = vadd.f32 %v51, %v52
    %54 = vst [vmem:[#allocation2] sm:$0xff] %v53
    // Predicated region
    $region22: #{tpu_custom_call.1} parent=1 // pred_check
      %p55 = pneg %p36
    $region23: #{tpu_custom_call.1} parent=1 // pred_check_branch
      %57 = sbr.rel (%p55) target = $region25
    $region24: #{tpu_custom_call.1} parent=1 // pred_region
      %v58 = vld [vmem:[#allocation2] sm:$0xff]
      %v59 = vrot.slane %v58, 4
      %v60 = vadd.f32 %v58, %v59
      %v61 = vrot.slane %v60, 2
      %v62 = vadd.f32 %v60, %v61
      %v63 = vrot.slane %v62, 1
      %v64 = vadd.f32 %v62, %v63
      %65 = vst [vmem:[#allocation8] sm:$0x1] %v64
    $region25: #{tpu_custom_call.1} parent=1 // pred_fallthru
      _
    // Predicated region
    $region26: #{tpu_custom_call.1} parent=1 // pred_check
      _
    $region27: #{tpu_custom_call.1} parent=1 // pred_check_branch
      %67 = sbr.rel (0) target = $region29
    $region28: #{tpu_custom_call.1} parent=1 // pred_region
      %s69 = ssub.s32 16, 16
      %70 = vsyncadd [#allocation5], %s69
      %s72 = sshll.u32 [#allocation8], 4
      %s73 = int_to_ptr.vmem [resolvable:$true] %s72
      %75 = dma.vmem_to_hbm [thread:$0]  %s73, 16, %s2, [#allocation5]
    $region29: #{tpu_custom_call.1} parent=1 // pred_fallthru
      _
    // Predicated region
    $region30: #{tpu_custom_call.1} parent=1 // pred_check
      _
    $region31: #{tpu_custom_call.1} parent=1 // pred_check_branch
      %77 = sbr.rel (0) target = $region33
    $region32: #{tpu_custom_call.1} parent=1 // pred_region
      %78 = dma.done [#allocation5], 16
    $region33: #{tpu_custom_call.1} parent=1 // pred_fallthru
      _
    %79 = vsyncpa [#allocation4], 1
    %80 = vsyncpa [#allocation7], 1
    %81 = vsyncpa [#allocation5], 1

</llo_original>
